<compile_context>
chip_gen: v5e
topology: v5e:2x2
jax: 0.10.0
libtpu: 0.0.40
codegen_flags: <defaults>
</compile_context>

<pallas_src>
import math

import jax
import jax.numpy as jnp
from jax import lax
from jax.experimental import pallas as pl
from jax.experimental.pallas import tpu as pltpu

_LANE = 128
# Above the default scoped limits (v5e 16 MiB / v6e,v7x 32 MiB) but under
# v7x's 64 MiB/TC physical VMEM, so the same setting is safe on all gens.
_VMEM_LIMIT_BYTES = 48 * 1024 * 1024


def _round_up(x, m):
    return ((x + m - 1) // m) * m


def _pad_to(a, rows, cols):
    r, c = a.shape
    if r == rows and c == cols:
        return a
    return jnp.pad(a, ((0, rows - r), (0, cols - c)))


def _pick_tile(extent, preferred):
    """Largest multiple-of-8 tile <= preferred that divides extent."""
    t = (min(preferred, extent) // 8) * 8
    while t >= 8:
        if extent % t == 0:
            return t
        t -= 8
    return extent


# -----------------------------------------------------------------------------
# Path A (small S): single grid=() fused attention block, fully VMEM-resident.
# -----------------------------------------------------------------------------
def _fused_attn_block_kernel(x_ref, wqkv_ref, wo_ref, o_ref):
    x = x_ref[...]                                               # (S, Dp) bf16
    d = x.shape[1]
    qkv = jnp.dot(x, wqkv_ref[...],
                  preferred_element_type=jnp.float32)            # (S, 3Dp) f32
    # Column slices land on 128-lane boundaries (Dp is a multiple of 128),
    # so these are cheap layout-aligned views, not shuffle copies.
    q = qkv[:, 0 * d:1 * d].astype(jnp.bfloat16)
    k = qkv[:, 1 * d:2 * d].astype(jnp.bfloat16)
    v = qkv[:, 2 * d:3 * d].astype(jnp.bfloat16)
    s = lax.dot_general(q, k, dimension_numbers=(((1,), (1,)), ((), ())),
                        preferred_element_type=jnp.float32)      # (S, S) f32
    m = jnp.max(s, axis=-1, keepdims=True)
    p = jnp.exp(s - m)                                           # f32 exp (v5e-safe)
    l = jnp.sum(p, axis=-1, keepdims=True)
    attn = jnp.dot(p.astype(jnp.bfloat16), v,
                   preferred_element_type=jnp.float32)           # (S, Dp) f32
    attn = (attn * pl.reciprocal(l, approx=True)).astype(jnp.bfloat16)
    out = jnp.dot(attn, wo_ref[...], preferred_element_type=jnp.float32)
    o_ref[...] = (out + x.astype(jnp.float32)).astype(o_ref.dtype)


def fused_attn_block_pallas(x_bf16, wqkv_bf16, wo_bf16):
    S, Dp = x_bf16.shape
    flops = 2 * S * Dp * 3 * Dp + 4 * S * S * Dp + 2 * S * Dp * Dp
    bytes_accessed = S * Dp * 2 + Dp * 3 * Dp * 2 + Dp * Dp * 2 + S * Dp * 4
    return pl.pallas_call(
        _fused_attn_block_kernel,
        out_shape=jax.ShapeDtypeStruct((S, Dp), jnp.float32),
        compiler_params=pltpu.CompilerParams(
            vmem_limit_bytes=_VMEM_LIMIT_BYTES),
        cost_estimate=pl.CostEstimate(flops=flops, transcendentals=S * S,
                                      bytes_accessed=bytes_accessed),
    )(x_bf16, wqkv_bf16, wo_bf16)


# -----------------------------------------------------------------------------
# Path B, kernel 1: fused K/V projection -> one wide lane-dense (S, 2*Dp) slab.
# -----------------------------------------------------------------------------
def _kv_proj_kernel(x_ref, w_ref, kv_ref):
    kv_ref[...] = jnp.dot(x_ref[...], w_ref[...],
                          preferred_element_type=jnp.float32).astype(kv_ref.dtype)


def kv_proj_pallas(x_bf16, w_kv_bf16, *, ts):
    S, Dp = x_bf16.shape
    D2 = w_kv_bf16.shape[1]
    flops = 2 * S * Dp * D2
    bytes_accessed = S * Dp * 2 + Dp * D2 * 2 + S * D2 * 2
    # TODO(synk): for production Dp (>= 2048) stream w_kv along its output
    # columns with an extra parallel grid axis instead of keeping the whole
    # (Dp, 2*Dp) block VMEM-resident (required on v7x's 64 MiB VMEM/TC).
    return pl.pallas_call(
        _kv_proj_kernel,
        out_shape=jax.ShapeDtypeStruct((S, D2), jnp.bfloat16),
        grid_spec=pltpu.PrefetchScalarGridSpec(
            num_scalar_prefetch=0,
            grid=(S // ts,),
            in_specs=[pl.BlockSpec((ts, Dp), lambda i: (i, 0)),
                      pl.BlockSpec((Dp, D2), lambda i: (0, 0))],   # VMEM-resident
            out_specs=pl.BlockSpec((ts, D2), lambda i: (i, 0))),
        compiler_params=pltpu.CompilerParams(
            dimension_semantics=("parallel",),
            vmem_limit_bytes=_VMEM_LIMIT_BYTES),
        cost_estimate=pl.CostEstimate(flops=flops, transcendentals=0,
                                      bytes_accessed=bytes_accessed),
    )(x_bf16, w_kv_bf16)


# -----------------------------------------------------------------------------
# Path B, kernel 2: flash attention with fused Q projection, out projection and
# residual.  grid = (S//tq [parallel], S//tk [arbitrary, online-softmax]).
# -----------------------------------------------------------------------------
def _flash_attn_kernel(x_ref, wq_ref, k_ref, v_ref, wo_ref, o_ref,
                       q_sc, m_sc, l_sc, acc_sc):
    kv = pl.program_id(1)

    @pl.when(kv == 0)
    def _():
        # Q projection fused here (1/sqrt(D) scale already folded into wq on
        # host); computed once per q tile and kept in VMEM across the kv sweep.
        q_sc[...] = jnp.dot(x_ref[...], wq_ref[...],
                            preferred_element_type=jnp.float32).astype(q_sc.dtype)
        m_sc[...] = jnp.full_like(m_sc, -jnp.inf)
        l_sc[...] = jnp.zeros_like(l_sc)
        acc_sc[...] = jnp.zeros_like(acc_sc)

    # Scores: contract last dims directly (no explicit k.T / XLU transpose).
    s = lax.dot_general(q_sc[...], k_ref[...],
                        dimension_numbers=(((1,), (1,)), ((), ())),
                        preferred_element_type=jnp.float32)       # (tq, tk) f32

    m_prev = m_sc[...]
    m_new = jnp.maximum(m_prev, jnp.max(s, axis=-1, keepdims=True))
    alpha = jnp.exp(m_prev - m_new)
    p = jnp.exp(s - m_new)                                        # f32 softmax math
    l_sc[...] = alpha * l_sc[...] + jnp.sum(p, axis=-1, keepdims=True)
    acc_sc[...] = alpha * acc_sc[...] + jnp.dot(
        p.astype(v_ref.dtype), v_ref[...], preferred_element_type=jnp.float32)
    m_sc[...] = m_new

    @pl.when(kv == pl.num_programs(1) - 1)
    def _():
        inv_l = pl.reciprocal(l_sc[...], approx=True)             # EUP vrcp slot
        attn = (acc_sc[...] * inv_l).astype(wo_ref.dtype)         # bf16 MXU input
        out = jnp.dot(attn, wo_ref[...], preferred_element_type=jnp.float32)
        # Residual uses the already-bf16 x tile; the add happens in f32.
        o_ref[...] = (out + x_ref[...].astype(jnp.float32)).astype(o_ref.dtype)


def flash_attn_pallas(x_bf16, wq_bf16, kv_bf16, wo_bf16, *, tq, tk):
    S, Dp = x_bf16.shape
    n_q = S // tq
    flops = (2 * S * Dp * Dp          # q projection
             + 2 * S * S * Dp         # q @ k^T
             + 2 * S * S * Dp         # p @ v
             + 2 * S * Dp * Dp)       # out projection
    # K and V are re-streamed once per q tile (S // tq replays).
    bytes_accessed = (S * Dp * 2                    # x (bf16, proj + residual)
                      + 2 * S * Dp * 2 * n_q        # K + V replayed n_q times
                      + 2 * Dp * Dp * 2             # wq + wo (bf16)
                      + S * Dp * 4)                 # output (f32)
    return pl.pallas_call(
        _flash_attn_kernel,
        out_shape=jax.ShapeDtypeStruct((S, Dp), jnp.float32),
        grid_spec=pltpu.PrefetchScalarGridSpec(
            num_scalar_prefetch=0,
            grid=(n_q, S // tk),
            in_specs=[
                pl.BlockSpec((tq, Dp), lambda i, j: (i, 0)),   # x tile (q proj + res)
                pl.BlockSpec((Dp, Dp), lambda i, j: (0, 0)),   # wq (VMEM-resident)
                pl.BlockSpec((tk, Dp), lambda i, j: (j, 0)),   # K = kv columns [0, Dp)
                pl.BlockSpec((tk, Dp), lambda i, j: (j, 1)),   # V = kv columns [Dp, 2Dp)
                pl.BlockSpec((Dp, Dp), lambda i, j: (0, 0)),   # wo (VMEM-resident)
            ],
            out_specs=pl.BlockSpec((tq, Dp), lambda i, j: (i, 0)),
            scratch_shapes=[
                pltpu.VMEM((tq, Dp), jnp.bfloat16),   # projected q tile
                pltpu.VMEM((tq, 1), jnp.float32),     # running max
                pltpu.VMEM((tq, 1), jnp.float32),     # running denom
                pltpu.VMEM((tq, Dp), jnp.float32),    # output accumulator
            ]),
        compiler_params=pltpu.CompilerParams(
            # q axis parallel -> megacore sharding; kv axis is the online
            # softmax reduction so it must stay arbitrary.
            dimension_semantics=("parallel", "arbitrary"),
            vmem_limit_bytes=_VMEM_LIMIT_BYTES),
        cost_estimate=pl.CostEstimate(flops=flops, transcendentals=S * S,
                                      bytes_accessed=bytes_accessed),
    )(x_bf16, wq_bf16, kv_bf16, kv_bf16, wo_bf16)


# -----------------------------------------------------------------------------
# attn1: full self-attention block on (S, D) activations.
# -----------------------------------------------------------------------------
def attn1_pallas(x, wq, wk, wv, wo, *, ts=256, tq=256, tk=256, force_path=None):
    """qkv proj -> softmax attention -> out proj -> residual, on TPU via Pallas.

    The feature dim is zero-padded to a multiple of 128 so every block is
    lane-dense (unmasked stores, full MXU K/N).  Padding is exact and removed
    at the end.
    """
    S, D = x.shape
    scale = 1.0 / math.sqrt(D)
    Dp = _round_up(max(D, _LANE), _LANE)

    wq_p = _pad_to(wq * scale, Dp, Dp).astype(jnp.bfloat16)   # scale folded into wq
    wk_p = _pad_to(wk, Dp, Dp).astype(jnp.bfloat16)
    wv_p = _pad_to(wv, Dp, Dp).astype(jnp.bfloat16)
    wo_p = _pad_to(wo, Dp, Dp).astype(jnp.bfloat16)
    x_p = _pad_to(x, S, Dp).astype(jnp.bfloat16)              # halves x DMA bytes

    # Rough VMEM footprint of the single-shot path (the (S, S) scores dominate).
    fused_bytes = (S * Dp * 2 + S * Dp * 4 + 4 * Dp * Dp * 2
                   + 2 * S * S * 4 + S * 3 * Dp * 4)
    use_fused = fused_bytes <= 12 * 1024 * 1024
    if force_path == "fused":
        use_fused = True
    elif force_path == "tiled":
        use_fused = False

    if use_fused:
        # Demo / small-S regime: grids would be pure per-step overhead here.
        w_qkv = jnp.concatenate([wq_p, wk_p, wv_p], axis=1)    # (Dp, 3Dp)
        out_p = fused_attn_block_pallas(x_p, w_qkv, wo_p)
    else:
        ts_ = _pick_tile(S, ts)
        tq_ = _pick_tile(S, tq)
        tk_ = _pick_tile(S, tk)
        # TODO(synk): derive tq/tk per generation (pltpu.get_tpu_info): about
        # half-size tiles on v7x's 64 MiB/TC VMEM vs v5e/v6e's 128 MiB.
        w_kv = jnp.concatenate([wk_p, wv_p], axis=1)           # (Dp, 2Dp)
        kv = kv_proj_pallas(x_p, w_kv, ts=ts_)                 # (S, 2Dp) bf16
        out_p = flash_attn_pallas(x_p, wq_p, kv, wo_p, tq=tq_, tk=tk_)

    return out_p[:, :D].astype(x.dtype)


# -----------------------------------------------------------------------------
# Synthetic inner module (the `module` that ModuleWithGuidance wraps).
# Returns (out, text_out) where out[-1] is the (S, D) hidden states.
# -----------------------------------------------------------------------------
def inner_module_forward(params, hidden_states, text_states):
    h = attn1_pallas(hidden_states,
                     params["wq"], params["wk"], params["wv"], params["wo"])
    out = (h,)                      # out[-1] has shape '(t h w) d'
    text_out = text_states          # passthrough text branch
    return out, text_out


# -----------------------------------------------------------------------------
# ModuleWithGuidance equivalent.
# -----------------------------------------------------------------------------
class ModuleWithGuidance:
    def __init__(self, params, h, w, p, block_name, num_frames):
        self.params = params
        self.h = h
        self.w = w
        self.p = p
        self.block_name = block_name
        self.num_frames = num_frames
        self.starting_shape = "(t h w) d"
        self.saved_features = None

    def __call__(self, hidden_states, text_states):
        out, text_out = inner_module_forward(self.params, hidden_states, text_states)
        p_h = self.h // self.p
        p_w = self.w // self.p
        t = self.num_frames
        feats = out[-1]                                   # ((t*p_h*p_w), d)
        d = feats.shape[-1]
        # einops: '(t h w) d -> t d h w' (kept in XLA; pure layout op).
        self.saved_features = jnp.transpose(
            feats.reshape(t, p_h, p_w, d), (0, 3, 1, 2))  # (t, d, p_h, p_w)
        return out, text_out


# -----------------------------------------------------------------------------
# main
# -----------------------------------------------------------------------------
if __name__ == "__main__":
    # Small shapes: t=2 frames, h=w=16 spatial, patch p=2 -> 8x8 tokens/frame,
    # hidden dim d=32, text sequence of 8 tokens.
    num_frames, H, W, P = 2, 16, 16, 2
    D = 32
    p_h, p_w = H // P, W // P
    S = num_frames * p_h * p_w            # 2*8*8 = 128
    S_text = 8

    key = jax.random.PRNGKey(0)
    k_x, k_t, k_q, k_k, k_v, k_o = jax.random.split(key, 6)

    x = jax.random.normal(k_x, (S, D), dtype=jnp.float32)
    text = jax.random.normal(k_t, (S_text, D), dtype=jnp.float32)

    init = lambda k: jax.random.normal(k, (D, D), dtype=jnp.float32) / math.sqrt(D)
    params = {"wq": init(k_q), "wk": init(k_k), "wv": init(k_v), "wo": init(k_o)}

    mod = ModuleWithGuidance(params, H, W, P, block_name="down_block_0",
                             num_frames=num_frames)

    out, text_out = mod(x, text)
    jax.block_until_ready(out[-1])
    jax.block_until_ready(mod.saved_features)

    # sanity checks on shapes / semantics
    assert out[-1].shape == (S, D)
    assert mod.saved_features.shape == (num_frames, D, p_h, p_w)
    assert text_out.shape == (S_text, D)

    # correctness check against a pure-f32 JAX reference (kernels use bf16 MXU
    # inputs with f32 accumulation -> looser tolerance)
    def ref_attn(x, p):
        q, k, v = x @ p["wq"], x @ p["wk"], x @ p["wv"]
        s = (q @ k.T) / math.sqrt(D)
        a = jax.nn.softmax(s, axis=-1) @ v
        return a @ p["wo"] + x

    ref = ref_attn(x, params)

    # path A (fused single-invocation kernel, auto-selected at this scale)
    assert jnp.allclose(out[-1], ref, atol=5e-2, rtol=5e-2), (
        float(jnp.max(jnp.abs(out[-1] - ref))))

    # path B (tiled KV projection + flash attention), forced to exercise the
    # multi-step grid at this small size
    tiled = attn1_pallas(x, params["wq"], params["wk"], params["wv"],
                         params["wo"], ts=64, tq=64, tk=64, force_path="tiled")
    jax.block_until_ready(tiled)
    assert jnp.allclose(tiled, ref, atol=5e-2, rtol=5e-2), (
        float(jnp.max(jnp.abs(tiled - ref))))

    # saved_features must be the rearranged view of out[-1]
    ref_feats = jnp.transpose(out[-1].reshape(num_frames, p_h, p_w, D),
                              (0, 3, 1, 2))
    assert jnp.array_equal(mod.saved_features, ref_feats)

    print("KERNEL_OK")
</pallas_src>

<mosaic_0001>
module attributes {stable_mosaic.version = 11 : i64} {
  func.func @_fused_attn_block_kernel(%arg0: memref<128x128xbf16, #tpu.memory_space<vmem>>, %arg1: memref<128x384xbf16, #tpu.memory_space<vmem>>, %arg2: memref<128x128xbf16, #tpu.memory_space<vmem>>, %arg3: memref<128x128xf32, #tpu.memory_space<vmem>>) attributes {dimension_semantics = [], scalar_prefetch = 0 : i64, scratch_operands = 0 : i64, tpu.core_type = #tpu.core_type<tc>} {
    %c0 = arith.constant 0 : index
    %c0_0 = arith.constant 0 : index
    %0 = vector.load %arg0[%c0, %c0_0] : memref<128x128xbf16, #tpu.memory_space<vmem>>, vector<128x128xbf16>
    %c0_1 = arith.constant 0 : index
    %c0_2 = arith.constant 0 : index
    %1 = vector.load %arg1[%c0_1, %c0_2] : memref<128x384xbf16, #tpu.memory_space<vmem>>, vector<128x384xbf16>
    %cst = arith.constant dense<0.000000e+00> : vector<128x384xf32>
    %2 = tpu.matmul %0, %1, %cst {dimension_numbers = #tpu.dot_dimension_numbers<[1], [0], [0], [1], [0, 0, 1, 1], [], []>} : vector<128x128xbf16>, vector<128x384xbf16>, vector<128x384xf32> -> vector<128x384xf32>
    %3 = vector.extract_strided_slice %2 {offsets = [0, 0], sizes = [128, 128], strides = [1, 1]} : vector<128x384xf32> to vector<128x128xf32>
    %4 = arith.truncf %3 : vector<128x128xf32> to vector<128x128xbf16>
    %5 = vector.extract_strided_slice %2 {offsets = [0, 128], sizes = [128, 128], strides = [1, 1]} : vector<128x384xf32> to vector<128x128xf32>
    %6 = arith.truncf %5 : vector<128x128xf32> to vector<128x128xbf16>
    %7 = vector.extract_strided_slice %2 {offsets = [0, 256], sizes = [128, 128], strides = [1, 1]} : vector<128x384xf32> to vector<128x128xf32>
    %8 = arith.truncf %7 : vector<128x128xf32> to vector<128x128xbf16>
    %cst_3 = arith.constant dense<0.000000e+00> : vector<128x128xf32>
    %9 = tpu.matmul %4, %6, %cst_3 {dimension_numbers = #tpu.dot_dimension_numbers<[1], [1], [0], [0], [0, 0, 1, 0], [], []>} : vector<128x128xbf16>, vector<128x128xbf16>, vector<128x128xf32> -> vector<128x128xf32>
    %cst_4 = arith.constant dense<0xFF800000> : vector<128xf32>
    %10 = vector.multi_reduction <maximumf>, %9, %cst_4 [1] : vector<128x128xf32> to vector<128xf32>
    %11 = vector.shape_cast %10 : vector<128xf32> to vector<128x1xf32>
    %12 = vector.broadcast %11 : vector<128x1xf32> to vector<128x128xf32>
    %13 = arith.subf %9, %12 : vector<128x128xf32>
    %14 = math.exp %13 : vector<128x128xf32>
    %cst_5 = arith.constant dense<0.000000e+00> : vector<128xf32>
    %15 = vector.multi_reduction <add>, %14, %cst_5 [1] : vector<128x128xf32> to vector<128xf32>
    %16 = vector.shape_cast %15 : vector<128xf32> to vector<128x1xf32>
    %17 = arith.truncf %14 : vector<128x128xf32> to vector<128x128xbf16>
    %cst_6 = arith.constant dense<0.000000e+00> : vector<128x128xf32>
    %18 = tpu.matmul %17, %8, %cst_6 {dimension_numbers = #tpu.dot_dimension_numbers<[1], [0], [0], [1], [0, 0, 1, 1], [], []>} : vector<128x128xbf16>, vector<128x128xbf16>, vector<128x128xf32> -> vector<128x128xf32>
    %19 = tpu.reciprocal %16 {approx = true} : vector<128x1xf32> -> vector<128x1xf32>
    %20 = vector.broadcast %19 : vector<128x1xf32> to vector<128x128xf32>
    %21 = arith.mulf %18, %20 : vector<128x128xf32>
    %22 = arith.truncf %21 : vector<128x128xf32> to vector<128x128xbf16>
    %c0_7 = arith.constant 0 : index
    %c0_8 = arith.constant 0 : index
    %23 = vector.load %arg2[%c0_7, %c0_8] : memref<128x128xbf16, #tpu.memory_space<vmem>>, vector<128x128xbf16>
    %cst_9 = arith.constant dense<0.000000e+00> : vector<128x128xf32>
    %24 = tpu.matmul %22, %23, %cst_9 {dimension_numbers = #tpu.dot_dimension_numbers<[1], [0], [0], [1], [0, 0, 1, 1], [], []>} : vector<128x128xbf16>, vector<128x128xbf16>, vector<128x128xf32> -> vector<128x128xf32>
    %25 = arith.extf %0 : vector<128x128xbf16> to vector<128x128xf32>
    %26 = arith.addf %24, %25 : vector<128x128xf32>
    %c0_10 = arith.constant 0 : index
    %c0_11 = arith.constant 0 : index
    %27 = vector.load %arg3[%c0_10, %c0_11] : memref<128x128xf32, #tpu.memory_space<vmem>>, vector<128x128xf32>
    tpu.vector_store %arg3[%c0_10, %c0_11], %26 {strides = array<i32>} : memref<128x128xf32, #tpu.memory_space<vmem>>, vector<128x128xf32>,
    return
  }
}

</mosaic_0001>

<llo_original>
// kernel: tpu_custom_call.1
$region0: #{tpu_custom_call.1}
  #allocation0 [shape = 'u32[]', space=smem, size = 0x4, offset = 0x4, fixed_abs, tag = 'smem constant byte address 0x4 - core index']
  #allocation1 [shape = 'u32[72,128]{1,0:T(1,128)}', space=vmem, size = 0x9000, scoped, tag = 'internal scratch']
  %s0 = inlined_call_operand.hbm [shape: bf16[128,128], index: 0, kind: input, shape index: {}]
  %s1 = inlined_call_operand.hbm [shape: bf16[128,384], index: 1, kind: input, shape index: {}]
  %s2 = inlined_call_operand.hbm [shape: bf16[128,128], index: 2, kind: input, shape index: {}]
  %s3 = inlined_call_operand.hbm [shape: f32[128,128], index: 3, kind: output, shape index: {}]
  %s4 = sld [smem:[#allocation0]]
  $region34: #{tpu_custom_call.1} parent=0
    _
  %s6 = ssub.s32 1, %s4
  %s7 = scalar_select 0, %s6, %s4
  $region1: #{tpu_custom_call.1} parent=0
    #allocation2 [shape = 'u8[32768]{0}', space=vmem, size = 0x8000, scoped, tag = 'input window, operand 0, single buffered']
    #allocation3 [shape = 's32[1]{0}', space=sflag, size = 0x4, scoped, tag = 'scoped memory for tpu_custom_call.1']
    #allocation4 [shape = 's32[1]{0}', space=sflag, size = 0x4, scoped, tag = 'scoped memory for tpu_custom_call.1']
    #allocation5 [shape = 'u8[98304]{0}', space=vmem, size = 0x18000, scoped, tag = 'input window, operand 1, single buffered']
    #allocation6 [shape = 's32[1]{0}', space=sflag, size = 0x4, scoped, tag = 'scoped memory for tpu_custom_call.1']
    #allocation7 [shape = 'u8[32768]{0}', space=vmem, size = 0x8000, scoped, tag = 'input window, operand 2, single buffered']
    #allocation8 [shape = 'u8[65536]{0}', space=vmem, size = 0x10000, scoped, tag = 'output window, operand 0, single buffered']
    %8 = vsyncpa [#allocation3], 0
    %9 = vsyncpa [#allocation6], 0
    %10 = vsyncpa [#allocation4], 0
    // Predicated region
    $region2: #{tpu_custom_call.1} parent=1 // pred_check
      _
    $region3: #{tpu_custom_call.1} parent=1 // pred_check_branch
      %12 = sbr.rel (0) target = $region5
    $region4: #{tpu_custom_call.1} parent=1 // pred_region
      %14 = vsyncadd [#allocation3], 0
      %s15 = sshll.u32 %s0, 4
      %s16 = int_to_ptr.hbm [resolvable:$true] %s15
      %s17 = sshll.u32 [#allocation2], 4
      %s18 = int_to_ptr.vmem [resolvable:$true] %s17
      %23 = dma.hbm_to_vmem [thread:$0]  %s16, 1024, %s18, [#allocation3], 64, 64, 4
    $region5: #{tpu_custom_call.1} parent=1 // pred_fallthru
      _
    // Predicated region
    $region6: #{tpu_custom_call.1} parent=1 // pred_check
      _
    $region7: #{tpu_custom_call.1} parent=1 // pred_check_branch
      %25 = sbr.rel (0) target = $region9
    $region8: #{tpu_custom_call.1} parent=1 // pred_region
      %27 = vsyncadd [#allocation6], 0
      %s28 = sshll.u32 %s1, 4
      %s29 = int_to_ptr.hbm [resolvable:$true] %s28
      %s30 = sshll.u32 [#allocation5], 4
      %s31 = int_to_ptr.vmem [resolvable:$true] %s30
      %36 = dma.hbm_to_vmem [thread:$0]  %s29, 3072, %s31, [#allocation6], 192, 192, 12
    $region9: #{tpu_custom_call.1} parent=1 // pred_fallthru
      _
    // Predicated region
    $region10: #{tpu_custom_call.1} parent=1 // pred_check
      _
    $region11: #{tpu_custom_call.1} parent=1 // pred_check_branch
      %38 = sbr.rel (0) target = $region13
    $region12: #{tpu_custom_call.1} parent=1 // pred_region
      %40 = vsyncadd [#allocation6], 0
      %s41 = sshll.u32 %s2, 4
      %s42 = int_to_ptr.hbm [resolvable:$true] %s41
      %s43 = sshll.u32 [#allocation7], 4
      %s44 = int_to_ptr.vmem [resolvable:$true] %s43
      %49 = dma.hbm_to_vmem [thread:$0]  %s42, 1024, %s44, [#allocation6], 64, 64, 4
    $region13: #{tpu_custom_call.1} parent=1 // pred_fallthru
      _
    // Predicated region
    $region14: #{tpu_custom_call.1} parent=1 // pred_check
      _
    $region15: #{tpu_custom_call.1} parent=1 // pred_check_branch
      %51 = sbr.rel (0) target = $region17
    $region16: #{tpu_custom_call.1} parent=1 // pred_region
      %53 = dma.done [#allocation3], 1024
    $region17: #{tpu_custom_call.1} parent=1 // pred_fallthru
      _
    // Predicated region
    $region18: #{tpu_custom_call.1} parent=1 // pred_check
      _
    $region19: #{tpu_custom_call.1} parent=1 // pred_check_branch
      %55 = sbr.rel (0) target = $region21
    $region20: #{tpu_custom_call.1} parent=1 // pred_region
      %57 = dma.done [#allocation6], 3072
    $region21: #{tpu_custom_call.1} parent=1 // pred_fallthru
      _
    // Predicated region
    $region22: #{tpu_custom_call.1} parent=1 // pred_check
      _
    $region23: #{tpu_custom_call.1} parent=1 // pred_check_branch
      %59 = sbr.rel (0) target = $region25
    $region24: #{tpu_custom_call.1} parent=1 // pred_region
      %61 = dma.done [#allocation6], 1024
    $region25: #{tpu_custom_call.1} parent=1 // pred_fallthru
      _
    %v62 = vld [vmem:[#allocation2] sm:$0xf]
    %v63 = vld [vmem:[#allocation2 + $0x4] sm:$0xf]
    %v64 = vld [vmem:[#allocation2 + $0x8] sm:$0xf]
    %v65 = vld [vmem:[#allocation2 + $0xc] sm:$0xf]
    %v66 = vld [vmem:[#allocation2 + $0x10] sm:$0xf]
    %v67 = vld [vmem:[#allocation2 + $0x14] sm:$0xf]
    %v68 = vld [vmem:[#allocation2 + $0x18] sm:$0xf]
    %v69 = vld [vmem:[#allocation2 + $0x1c] sm:$0xf]
    %v70 = vld [vmem:[#allocation2 + $0x20] sm:$0xf]
    %v71 = vld [vmem:[#allocation2 + $0x24] sm:$0xf]
    %v72 = vld [vmem:[#allocation2 + $0x28] sm:$0xf]
    %v73 = vld [vmem:[#allocation2 + $0x2c] sm:$0xf]
    %v74 = vld [vmem:[#allocation2 + $0x30] sm:$0xf]
    %v75 = vld [vmem:[#allocation2 + $0x34] sm:$0xf]
    %v76 = vld [vmem:[#allocation2 + $0x38] sm:$0xf]
    %v77 = vld [vmem:[#allocation2 + $0x3c] sm:$0xf]
    %v78 = vld [vmem:[#allocation5] sm:$0xff]
    %v79 = vld [vmem:[#allocation5 + $0x8] sm:$0xf]
    %v80 = vld [vmem:[#allocation5 + $0xc] sm:$0xff]
    %v81 = vld [vmem:[#allocation5 + $0x14] sm:$0xf]
    %v82 = vld [vmem:[#allocation5 + $0x18] sm:$0xff]
    %v83 = vld [vmem:[#allocation5 + $0x20] sm:$0xf]
    %v84 = vld [vmem:[#allocation5 + $0x24] sm:$0xff]
    %v85 = vld [vmem:[#allocation5 + $0x2c] sm:$0xf]
    %v86 = vld [vmem:[#allocation5 + $0x30] sm:$0xff]
    %v87 = vld [vmem:[#allocation5 + $0x38] sm:$0xf]
    %v88 = vld [vmem:[#allocation5 + $0x3c] sm:$0xff]
    %v89 = vld [vmem:[#allocation5 + $0x44] sm:$0xf]
    %v90 = vld [vmem:[#allocation5 + $0x48] sm:$0xff]
    %v91 = vld [vmem:[#allocation5 + $0x50] sm:$0xf]
    %v92 = vld [vmem:[#allocation5 + $0x54] sm:$0xff]
    %v93 = vld [vmem:[#allocation5 + $0x5c] sm:$0xf]
    %v94 = vld [vmem:[#allocation5 + $0x60] sm:$0xff]
    %v95 = vld [vmem:[#allocation5 + $0x68] sm:$0xf]
    %v96 = vld [vmem:[#allocation5 + $0x6c] sm:$0xff]
    %v97 = vld [vmem:[#allocation5 + $0x74] sm:$0xf]
    %v98 = vld [vmem:[#allocation5 + $0x78] sm:$0xff]
    %v99 = vld [vmem:[#allocation5 + $0x80] sm:$0xf]
    %v100 = vld [vmem:[#allocation5 + $0x84] sm:$0xff]
    %v101 = vld [vmem:[#allocation5 + $0x8c] sm:$0xf]
    %v102 = vld [vmem:[#allocation5 + $0x90] sm:$0xff]
    %v103 = vld [vmem:[#allocation5 + $0x98] sm:$0xf]
    %v104 = vld [vmem:[#allocation5 + $0x9c] sm:$0xff]
    %v105 = vld [vmem:[#allocation5 + $0xa4] sm:$0xf]
    %v106 = vld [vmem:[#allocation5 + $0xa8] sm:$0xff]
    %v107 = vld [vmem:[#allocation5 + $0xb0] sm:$0xf]
    %v108 = vld [vmem:[#allocation5 + $0xb4] sm:$0xff]
    %v109 = vld [vmem:[#allocation5 + $0xbc] sm:$0xf]
    %v126 = vunpack.c.l.b16 %v62
    %v127 = vunpack.c.l.b16 %v63
    %v128 = vunpack.c.l.b16 %v64
    %v129 = vunpack.c.l.b16 %v65
    %v130 = vunpack.c.l.b16 %v66
    %v131 = vunpack.c.l.b16 %v67
    %v132 = vunpack.c.l.b16 %v68
    %v133 = vunpack.c.l.b16 %v69
    %v134 = vunpack.c.l.b16 %v70
    %v135 = vunpack.c.l.b16 %v71
    %v136 = vunpack.c.l.b16 %v72
    %v137 = vunpack.c.l.b16 %v73
    %v138 = vunpack.c.l.b16 %v74
    %v139 = vunpack.c.l.b16 %v75
    %v140 = vunpack.c.l.b16 %v76
    %v141 = vunpack.c.l.b16 %v77
    %v142 = vpack.c.b16 %v127, %v126
    %v143 = vpack.c.b16 %v129, %v128
    %v144 = vpack.c.b16 %v131, %v130
    %v145 = vpack.c.b16 %v133, %v132
    %v146 = vpack.c.b16 %v135, %v134
    %v147 = vpack.c.b16 %v137, %v136
    %v148 = vpack.c.b16 %v139, %v138
    %v149 = vpack.c.b16 %v141, %v140
    %v190 = vunpack.c.l.b16 %v78
    %v191 = vunpack.c.h.b16 %v78
    %v192 = vunpack.c.l.b16 %v79
    %v193 = vunpack.c.l.b16 %v80
    %v194 = vunpack.c.h.b16 %v80
    %v195 = vunpack.c.l.b16 %v81
    %v196 = vunpack.c.l.b16 %v82
    %v197 = vunpack.c.h.b16 %v82
    %v198 = vunpack.c.l.b16 %v83
    %v199 = vunpack.c.l.b16 %v84
    %v200 = vunpack.c.h.b16 %v84
    %v201 = vunpack.c.l.b16 %v85
    %v202 = vunpack.c.l.b16 %v86
    %v203 = vunpack.c.h.b16 %v86
    %v204 = vunpack.c.l.b16 %v87
    %v205 = vunpack.c.l.b16 %v88
    %v206 = vunpack.c.h.b16 %v88
    %v207 = vunpack.c.l.b16 %v89
    %v208 = vunpack.c.l.b16 %v90
    %v209 = vunpack.c.h.b16 %v90
    %v210 = vunpack.c.l.b16 %v91
    %v211 = vunpack.c.l.b16 %v92
    %v212 = vunpack.c.h.b16 %v92
    %v213 = vunpack.c.l.b16 %v93
    %v214 = vunpack.c.l.b16 %v94
    %v215 = vunpack.c.h.b16 %v94
    %v216 = vunpack.c.l.b16 %v95
    %v217 = vunpack.c.l.b16 %v96
    %v218 = vunpack.c.h.b16 %v96
    %v219 = vunpack.c.l.b16 %v97
    %v220 = vunpack.c.l.b16 %v98
    %v221 = vunpack.c.h.b16 %v98
    %v222 = vunpack.c.l.b16 %v99
    %v223 = vunpack.c.l.b16 %v100
    %v224 = vunpack.c.h.b16 %v100
    %v225 = vunpack.c.l.b16 %v101
    %v226 = vunpack.c.l.b16 %v102
    %v227 = vunpack.c.h.b16 %v102
    %v228 = vunpack.c.l.b16 %v103
    %v229 = vunpack.c.l.b16 %v104
    %v230 = vunpack.c.h.b16 %v104
    %v231 = vunpack.c.l.b16 %v105
    %v232 = vunpack.c.l.b16 %v106
    %v233 = vunpack.c.h.b16 %v106
    %v234 = vunpack.c.l.b16 %v107
    %v235 = vunpack.c.l.b16 %v108
    %v236 = vunpack.c.h.b16 %v108
    %v237 = vunpack.c.l.b16 %v109
    %v238 = vpack.c.b16 %v193, %v190
    %v239 = vpack.c.b16 %v194, %v191
    %v240 = vpack.c.b16 %v195, %v192
    %v241 = vpack.c.b16 %v199, %v196
    %v242 = vpack.c.b16 %v200, %v197
    %v243 = vpack.c.b16 %v201, %v198
    %v244 = vpack.c.b16 %v205, %v202
    %v245 = vpack.c.b16 %v206, %v203
    %v246 = vpack.c.b16 %v207, %v204
    %v247 = vpack.c.b16 %v211, %v208
    %v248 = vpack.c.b16 %v212, %v209
    %v249 = vpack.c.b16 %v213, %v210
    %v250 = vpack.c.b16 %v217, %v214
    %v251 = vpack.c.b16 %v218, %v215
    %v252 = vpack.c.b16 %v219, %v216
    %v253 = vpack.c.b16 %v223, %v220
    %v254 = vpack.c.b16 %v224, %v221
    %v255 = vpack.c.b16 %v225, %v222
    %v256 = vpack.c.b16 %v229, %v226
    %v257 = vpack.c.b16 %v230, %v227
    %v258 = vpack.c.b16 %v231, %v228
    %v259 = vpack.c.b16 %v235, %v232
    %v260 = vpack.c.b16 %v236, %v233
    %v261 = vpack.c.b16 %v237, %v234
    %286 = vmatpush.bf16.msra.mxu0 %v259
    %287 = vmatpush.bf16.msra.mxu0 %v256
    %288 = vmatpush.bf16.msra.mxu0 %v253
    %289 = vmatpush.bf16.msra.mxu0 %v250
    %290 = vmatpush.bf16.msra.mxu0 %v247
    %291 = vmatpush.bf16.msra.mxu0 %v244
    %292 = vmatpush.bf16.msra.mxu0 %v241
    %293 = vmatpush.bf16.msra.mxu0 %v238
    %294 = vmatmul.bf16.gmra.mxu0 %v142
    %v295 = vpop.f32.mrf.mxu0
    %v296 = vadd.f32 0.0, %v295
    %v297 = vpop.f32.mrf.mxu0
    %v298 = vadd.f32 0.0, %v297
    %299 = vmatmul.bf16.gmra.mxu0 %v143
    %v300 = vpop.f32.mrf.mxu0
    %v301 = vadd.f32 0.0, %v300
    %v302 = vpop.f32.mrf.mxu0
    %v303 = vadd.f32 0.0, %v302
    %304 = vmatmul.bf16.gmra.mxu0 %v144
    %v305 = vpop.f32.mrf.mxu0
    %v306 = vadd.f32 0.0, %v305
    %v307 = vpop.f32.mrf.mxu0
    %v308 = vadd.f32 0.0, %v307
    %309 = vmatmul.bf16.gmra.mxu0 %v145
    %v310 = vpop.f32.mrf.mxu0
    %v311 = vadd.f32 0.0, %v310
    %v312 = vpop.f32.mrf.mxu0
    %v313 = vadd.f32 0.0, %v312
    %314 = vmatmul.bf16.gmra.mxu0 %v146
    %v315 = vpop.f32.mrf.mxu0
    %v316 = vadd.f32 0.0, %v315
    %v317 = vpop.f32.mrf.mxu0
    %v318 = vadd.f32 0.0, %v317
    %319 = vmatmul.bf16.gmra.mxu0 %v147
    %v320 = vpop.f32.mrf.mxu0
    %v321 = vadd.f32 0.0, %v320
    %v322 = vpop.f32.mrf.mxu0
    %v323 = vadd.f32 0.0, %v322
    %324 = vmatmul.bf16.gmra.mxu0 %v148
    %v325 = vpop.f32.mrf.mxu0
    %v326 = vadd.f32 0.0, %v325
    %v327 = vpop.f32.mrf.mxu0
    %v328 = vadd.f32 0.0, %v327
    %329 = vmatmul.bf16.gmra.mxu0 %v149
    %v330 = vpop.f32.mrf.mxu0
    %v331 = vadd.f32 0.0, %v330
    %v332 = vpop.f32.mrf.mxu0
    %v333 = vadd.f32 0.0, %v332
    %334 = vdwg.mxu0
    %335 = vmatpush.bf16.msra.mxu0 %v260
    %336 = vmatpush.bf16.msra.mxu0 %v257
    %337 = vmatpush.bf16.msra.mxu0 %v254
    %338 = vmatpush.bf16.msra.mxu0 %v251
    %339 = vmatpush.bf16.msra.mxu0 %v248
    %340 = vmatpush.bf16.msra.mxu0 %v245
    %341 = vmatpush.bf16.msra.mxu0 %v242
    %342 = vmatpush.bf16.msra.mxu0 %v239
    %343 = vmatmul.bf16.gmra.mxu0 %v142
    %v344 = vpop.f32.mrf.mxu0
    %v345 = vadd.f32 0.0, %v344
    %v346 = vpop.f32.mrf.mxu0
    %v347 = vadd.f32 0.0, %v346
    %348 = vmatmul.bf16.gmra.mxu0 %v143
    %v349 = vpop.f32.mrf.mxu0
    %v350 = vadd.f32 0.0, %v349
    %v351 = vpop.f32.mrf.mxu0
    %v352 = vadd.f32 0.0, %v351
    %353 = vmatmul.bf16.gmra.mxu0 %v144
    %v354 = vpop.f32.mrf.mxu0
    %v355 = vadd.f32 0.0, %v354
    %v356 = vpop.f32.mrf.mxu0
    %v357 = vadd.f32 0.0, %v356
    %358 = vmatmul.bf16.gmra.mxu0 %v145
    %v359 = vpop.f32.mrf.mxu0
    %v360 = vadd.f32 0.0, %v359
    %v361 = vpop.f32.mrf.mxu0
    %v362 = vadd.f32 0.0, %v361
    %363 = vmatmul.bf16.gmra.mxu0 %v146
    %v364 = vpop.f32.mrf.mxu0
    %v365 = vadd.f32 0.0, %v364
    %v366 = vpop.f32.mrf.mxu0
    %v367 = vadd.f32 0.0, %v366
    %368 = vmatmul.bf16.gmra.mxu0 %v147
    %v369 = vpop.f32.mrf.mxu0
    %v370 = vadd.f32 0.0, %v369
    %v371 = vpop.f32.mrf.mxu0
    %v372 = vadd.f32 0.0, %v371
    %373 = vmatmul.bf16.gmra.mxu0 %v148
    %v374 = vpop.f32.mrf.mxu0
    %v375 = vadd.f32 0.0, %v374
    %v376 = vpop.f32.mrf.mxu0
    %v377 = vadd.f32 0.0, %v376
    %378 = vmatmul.bf16.gmra.mxu0 %v149
    %v379 = vpop.f32.mrf.mxu0
    %v380 = vadd.f32 0.0, %v379
    %v381 = vpop.f32.mrf.mxu0
    %v382 = vadd.f32 0.0, %v381
    %383 = vdwg.mxu0
    %384 = vmatpush.bf16.msra.mxu0 %v261
    %385 = vmatpush.bf16.msra.mxu0 %v258
    %386 = vmatpush.bf16.msra.mxu0 %v255
    %387 = vmatpush.bf16.msra.mxu0 %v252
    %388 = vmatpush.bf16.msra.mxu0 %v249
    %389 = vmatpush.bf16.msra.mxu0 %v246
    %390 = vmatpush.bf16.msra.mxu0 %v243
    %391 = vmatpush.bf16.msra.mxu0 %v240
    %392 = vmatmul.bf16.gmra.mxu0 %v142
    %v393 = vpop.f32.mrf.mxu0
    %v394 = vadd.f32 0.0, %v393
    %v395 = vpop.f32.mrf.mxu0
    %v396 = vadd.f32 0.0, %v395
    %397 = vmatmul.bf16.gmra.mxu0 %v143
    %v398 = vpop.f32.mrf.mxu0
    %v399 = vadd.f32 0.0, %v398
    %v400 = vpop.f32.mrf.mxu0
    %v401 = vadd.f32 0.0, %v400
    %402 = vmatmul.bf16.gmra.mxu0 %v144
    %v403 = vpop.f32.mrf.mxu0
    %v404 = vadd.f32 0.0, %v403
    %v405 = vpop.f32.mrf.mxu0
    %v406 = vadd.f32 0.0, %v405
    %407 = vmatmul.bf16.gmra.mxu0 %v145
    %v408 = vpop.f32.mrf.mxu0
    %v409 = vadd.f32 0.0, %v408
    %v410 = vpop.f32.mrf.mxu0
    %v411 = vadd.f32 0.0, %v410
    %412 = vmatmul.bf16.gmra.mxu0 %v146
    %v413 = vpop.f32.mrf.mxu0
    %v414 = vadd.f32 0.0, %v413
    %v415 = vpop.f32.mrf.mxu0
    %v416 = vadd.f32 0.0, %v415
    %417 = vmatmul.bf16.gmra.mxu0 %v147
    %v418 = vpop.f32.mrf.mxu0
    %v419 = vadd.f32 0.0, %v418
    %v420 = vpop.f32.mrf.mxu0
    %v421 = vadd.f32 0.0, %v420
    %422 = vmatmul.bf16.gmra.mxu0 %v148
    %v423 = vpop.f32.mrf.mxu0
    %v424 = vadd.f32 0.0, %v423
    %v425 = vpop.f32.mrf.mxu0
    %v426 = vadd.f32 0.0, %v425
    %427 = vmatmul.bf16.gmra.mxu0 %v149
    %v428 = vpop.f32.mrf.mxu0
    %v429 = vadd.f32 0.0, %v428
    %v430 = vpop.f32.mrf.mxu0
    %v431 = vadd.f32 0.0, %v430
    %432 = vdwg.mxu0
    %v433 = vpack.c.bf16 %v298, %v296
    %v434 = vpack.c.bf16 %v303, %v301
    %v435 = vpack.c.bf16 %v308, %v306
    %v436 = vpack.c.bf16 %v313, %v311
    %v437 = vpack.c.bf16 %v318, %v316
    %v438 = vpack.c.bf16 %v323, %v321
    %v439 = vpack.c.bf16 %v328, %v326
    %v440 = vpack.c.bf16 %v333, %v331
    %v441 = vpack.c.bf16 %v347, %v345
    %v442 = vpack.c.bf16 %v352, %v350
    %v443 = vpack.c.bf16 %v357, %v355
    %v444 = vpack.c.bf16 %v362, %v360
    %v445 = vpack.c.bf16 %v367, %v365
    %v446 = vpack.c.bf16 %v372, %v370
    %v447 = vpack.c.bf16 %v377, %v375
    %v448 = vpack.c.bf16 %v382, %v380
    %v449 = vpack.c.bf16 %v396, %v394
    %v450 = vpack.c.bf16 %v401, %v399
    %v451 = vpack.c.bf16 %v406, %v404
    %v452 = vpack.c.bf16 %v411, %v409
    %v453 = vpack.c.bf16 %v416, %v414
    %v454 = vpack.c.bf16 %v421, %v419
    %v455 = vpack.c.bf16 %v426, %v424
    %v456 = vpack.c.bf16 %v431, %v429
    %457 = vmatpush.bf16.xpose.msra.mxu0 %v448
    %458 = vmatpush.bf16.xpose.msra.mxu0 %v447
    %459 = vmatpush.bf16.xpose.msra.mxu0 %v446
    %460 = vmatpush.bf16.xpose.msra.mxu0 %v445
    %461 = vmatpush.bf16.xpose.msra.mxu0 %v444
    %462 = vmatpush.bf16.xpose.msra.mxu0 %v443
    %463 = vmatpush.bf16.xpose.msra.mxu0 %v442
    %464 = vmatpush.bf16.xpose.msra.mxu0 %v441
    %465 = vmatmul.bf16.gmra.mxu0 %v433
    %v466 = vpop.f32.mrf.mxu0
    %v467 = vadd.f32 0.0, %v466
    %v468 = vpop.f32.mrf.mxu0
    %v469 = vadd.f32 0.0, %v468
    %470 = vmatmul.bf16.gmra.mxu0 %v434
    %v471 = vpop.f32.mrf.mxu0
    %v472 = vadd.f32 0.0, %v471
    %v473 = vpop.f32.mrf.mxu0
    %v474 = vadd.f32 0.0, %v473
    %475 = vmatmul.bf16.gmra.mxu0 %v435
    %v476 = vpop.f32.mrf.mxu0
    %v477 = vadd.f32 0.0, %v476
    %v478 = vpop.f32.mrf.mxu0
    %v479 = vadd.f32 0.0, %v478
    %480 = vmatmul.bf16.gmra.mxu0 %v436
    %v481 = vpop.f32.mrf.mxu0
    %v482 = vadd.f32 0.0, %v481
    %v483 = vpop.f32.mrf.mxu0
    %v484 = vadd.f32 0.0, %v483
    %485 = vmatmul.bf16.gmra.mxu0 %v437
    %v486 = vpop.f32.mrf.mxu0
    %v487 = vadd.f32 0.0, %v486
    %v488 = vpop.f32.mrf.mxu0
    %v489 = vadd.f32 0.0, %v488
    %490 = vmatmul.bf16.gmra.mxu0 %v438
    %v491 = vpop.f32.mrf.mxu0
    %v492 = vadd.f32 0.0, %v491
    %v493 = vpop.f32.mrf.mxu0
    %v494 = vadd.f32 0.0, %v493
    %495 = vmatmul.bf16.gmra.mxu0 %v439
    %v496 = vpop.f32.mrf.mxu0
    %v497 = vadd.f32 0.0, %v496
    %v498 = vpop.f32.mrf.mxu0
    %v499 = vadd.f32 0.0, %v498
    %500 = vmatmul.bf16.gmra.mxu0 %v440
    %v501 = vpop.f32.mrf.mxu0
    %v502 = vadd.f32 0.0, %v501
    %v503 = vpop.f32.mrf.mxu0
    %v504 = vadd.f32 0.0, %v503
    %505 = vdwg.mxu0
    %506 = vmax.xlane.f32.xlu0 %v467
    %v507 = vpop.xlane.xlu0 %506
    %508 = vmax.xlane.f32.xlu0 %v469
    %v509 = vpop.xlane.xlu0 %508
    %510 = vmax.xlane.f32.xlu0 %v472
    %v511 = vpop.xlane.xlu0 %510
    %512 = vmax.xlane.f32.xlu0 %v474
    %v513 = vpop.xlane.xlu0 %512
    %514 = vmax.xlane.f32.xlu0 %v477
    %v515 = vpop.xlane.xlu0 %514
    %516 = vmax.xlane.f32.xlu0 %v479
    %v517 = vpop.xlane.xlu0 %516
    %518 = vmax.xlane.f32.xlu0 %v482
    %v519 = vpop.xlane.xlu0 %518
    %520 = vmax.xlane.f32.xlu0 %v484
    %v521 = vpop.xlane.xlu0 %520
    %522 = vmax.xlane.f32.xlu0 %v487
    %v523 = vpop.xlane.xlu0 %522
    %524 = vmax.xlane.f32.xlu0 %v489
    %v525 = vpop.xlane.xlu0 %524
    %526 = vmax.xlane.f32.xlu0 %v492
    %v527 = vpop.xlane.xlu0 %526
    %528 = vmax.xlane.f32.xlu0 %v494
    %v529 = vpop.xlane.xlu0 %528
    %530 = vmax.xlane.f32.xlu0 %v497
    %v531 = vpop.xlane.xlu0 %530
    %532 = vmax.xlane.f32.xlu0 %v499
    %v533 = vpop.xlane.xlu0 %532
    %534 = vmax.xlane.f32.xlu0 %v502
    %v535 = vpop.xlane.xlu0 %534
    %536 = vmax.xlane.f32.xlu0 %v504
    %v537 = vpop.xlane.xlu0 %536
    %v538 = vsub.f32 %v467, %v507
    %v539 = vsub.f32 %v469, %v509
    %v540 = vsub.f32 %v472, %v511
    %v541 = vsub.f32 %v474, %v513
    %v542 = vsub.f32 %v477, %v515
    %v543 = vsub.f32 %v479, %v517
    %v544 = vsub.f32 %v482, %v519
    %v545 = vsub.f32 %v484, %v521
    %v546 = vsub.f32 %v487, %v523
    %v547 = vsub.f32 %v489, %v525
    %v548 = vsub.f32 %v492, %v527
    %v549 = vsub.f32 %v494, %v529
    %v550 = vsub.f32 %v497, %v531
    %v551 = vsub.f32 %v499, %v533
    %v552 = vsub.f32 %v502, %v535
    %v553 = vsub.f32 %v504, %v537
    %v554 = vmul.f32 %v538, 1.442695
    %v555 = vpow.pop %v554
    %v556 = vmul.f32 %v539, 1.442695
    %v557 = vpow.pop %v556
    %v558 = vmul.f32 %v540, 1.442695
    %v559 = vpow.pop %v558
    %v560 = vmul.f32 %v541, 1.442695
    %v561 = vpow.pop %v560
    %v562 = vmul.f32 %v542, 1.442695
    %v563 = vpow.pop %v562
    %v564 = vmul.f32 %v543, 1.442695
    %v565 = vpow.pop %v564
    %v566 = vmul.f32 %v544, 1.442695
    %v567 = vpow.pop %v566
    %v568 = vmul.f32 %v545, 1.442695
    %v569 = vpow.pop %v568
    %v570 = vmul.f32 %v546, 1.442695
    %v571 = vpow.pop %v570
    %v572 = vmul.f32 %v547, 1.442695
    %v573 = vpow.pop %v572
    %v574 = vmul.f32 %v548, 1.442695
    %v575 = vpow.pop %v574
    %v576 = vmul.f32 %v549, 1.442695
    %v577 = vpow.pop %v576
    %v578 = vmul.f32 %v550, 1.442695
    %v579 = vpow.pop %v578
    %v580 = vmul.f32 %v551, 1.442695
    %v581 = vpow.pop %v580
    %v582 = vmul.f32 %v552, 1.442695
    %v583 = vpow.pop %v582
    %v584 = vmul.f32 %v553, 1.442695
    %v585 = vpow.pop %v584
    %586 = vadd.xlane.f32.xlu0 %v555
    %v587 = vpop.xlane.xlu0 %586
    %588 = vadd.xlane.f32.xlu0 %v557
    %v589 = vpop.xlane.xlu0 %588
    %590 = vadd.xlane.f32.xlu0 %v559
    %v591 = vpop.xlane.xlu0 %590
    %592 = vadd.xlane.f32.xlu0 %v561
    %v593 = vpop.xlane.xlu0 %592
    %594 = vadd.xlane.f32.xlu0 %v563
    %v595 = vpop.xlane.xlu0 %594
    %596 = vadd.xlane.f32.xlu0 %v565
    %v597 = vpop.xlane.xlu0 %596
    %598 = vadd.xlane.f32.xlu0 %v567
    %v599 = vpop.xlane.xlu0 %598
    %600 = vadd.xlane.f32.xlu0 %v569
    %v601 = vpop.xlane.xlu0 %600
    %602 = vadd.xlane.f32.xlu0 %v571
    %v603 = vpop.xlane.xlu0 %602
    %604 = vadd.xlane.f32.xlu0 %v573
    %v605 = vpop.xlane.xlu0 %604
    %606 = vadd.xlane.f32.xlu0 %v575
    %v607 = vpop.xlane.xlu0 %606
    %608 = vadd.xlane.f32.xlu0 %v577
    %v609 = vpop.xlane.xlu0 %608
    %610 = vadd.xlane.f32.xlu0 %v579
    %v611 = vpop.xlane.xlu0 %610
    %612 = vadd.xlane.f32.xlu0 %v581
    %v613 = vpop.xlane.xlu0 %612
    %614 = vadd.xlane.f32.xlu0 %v583
    %v615 = vpop.xlane.xlu0 %614
    %616 = vadd.xlane.f32.xlu0 %v585
    %v617 = vpop.xlane.xlu0 %616
    %v618 = vpack.c.bf16 %v557, %v555
    %v619 = vpack.c.bf16 %v561, %v559
    %v620 = vpack.c.bf16 %v565, %v563
    %v621 = vpack.c.bf16 %v569, %v567
    %v622 = vpack.c.bf16 %v573, %v571
    %v623 = vpack.c.bf16 %v577, %v575
    %v624 = vpack.c.bf16 %v581, %v579
    %v625 = vpack.c.bf16 %v585, %v583
    %626 = vmatpush.bf16.msra.mxu0 %v456
    %627 = vmatpush.bf16.msra.mxu0 %v455
    %628 = vmatpush.bf16.msra.mxu0 %v454
    %629 = vmatpush.bf16.msra.mxu0 %v453
    %630 = vmatpush.bf16.msra.mxu0 %v452
    %631 = vmatpush.bf16.msra.mxu0 %v451
    %632 = vmatpush.bf16.msra.mxu0 %v450
    %633 = vmatpush.bf16.msra.mxu0 %v449
    %634 = vmatmul.bf16.gmra.mxu0 %v618
    %v635 = vpop.f32.mrf.mxu0
    %v636 = vadd.f32 0.0, %v635
    %v637 = vpop.f32.mrf.mxu0
    %v638 = vadd.f32 0.0, %v637
    %639 = vmatmul.bf16.gmra.mxu0 %v619
    %v640 = vpop.f32.mrf.mxu0
    %v641 = vadd.f32 0.0, %v640
    %v642 = vpop.f32.mrf.mxu0
    %v643 = vadd.f32 0.0, %v642
    %644 = vmatmul.bf16.gmra.mxu0 %v620
    %v645 = vpop.f32.mrf.mxu0
    %v646 = vadd.f32 0.0, %v645
    %v647 = vpop.f32.mrf.mxu0
    %v648 = vadd.f32 0.0, %v647
    %649 = vmatmul.bf16.gmra.mxu0 %v621
    %v650 = vpop.f32.mrf.mxu0
    %v651 = vadd.f32 0.0, %v650
    %v652 = vpop.f32.mrf.mxu0
    %v653 = vadd.f32 0.0, %v652
    %654 = vmatmul.bf16.gmra.mxu0 %v622
    %v655 = vpop.f32.mrf.mxu0
    %v656 = vadd.f32 0.0, %v655
    %v657 = vpop.f32.mrf.mxu0
    %v658 = vadd.f32 0.0, %v657
    %659 = vmatmul.bf16.gmra.mxu0 %v623
    %v660 = vpop.f32.mrf.mxu0
    %v661 = vadd.f32 0.0, %v660
    %v662 = vpop.f32.mrf.mxu0
    %v663 = vadd.f32 0.0, %v662
    %664 = vmatmul.bf16.gmra.mxu0 %v624
    %v665 = vpop.f32.mrf.mxu0
    %v666 = vadd.f32 0.0, %v665
    %v667 = vpop.f32.mrf.mxu0
    %v668 = vadd.f32 0.0, %v667
    %669 = vmatmul.bf16.gmra.mxu0 %v625
    %v670 = vpop.f32.mrf.mxu0
    %v671 = vadd.f32 0.0, %v670
    %v672 = vpop.f32.mrf.mxu0
    %v673 = vadd.f32 0.0, %v672
    %674 = vdwg.mxu0
    %v675 = vrcp.pop %v587
    %v676 = vrcp.pop %v589
    %v677 = vrcp.pop %v591
    %v678 = vrcp.pop %v593
    %v679 = vrcp.pop %v595
    %v680 = vrcp.pop %v597
    %v681 = vrcp.pop %v599
    %v682 = vrcp.pop %v601
    %v683 = vrcp.pop %v603
    %v684 = vrcp.pop %v605
    %v685 = vrcp.pop %v607
    %v686 = vrcp.pop %v609
    %v687 = vrcp.pop %v611
    %v688 = vrcp.pop %v613
    %v689 = vrcp.pop %v615
    %v690 = vrcp.pop %v617
    %v691 = vmul.f32 %v636, %v675
    %v692 = vmul.f32 %v638, %v676
    %v693 = vmul.f32 %v641, %v677
    %v694 = vmul.f32 %v643, %v678
    %v695 = vmul.f32 %v646, %v679
    %v696 = vmul.f32 %v648, %v680
    %v697 = vmul.f32 %v651, %v681
    %v698 = vmul.f32 %v653, %v682
    %v699 = vmul.f32 %v656, %v683
    %v700 = vmul.f32 %v658, %v684
    %v701 = vmul.f32 %v661, %v685
    %v702 = vmul.f32 %v663, %v686
    %v703 = vmul.f32 %v666, %v687
    %v704 = vmul.f32 %v668, %v688
    %v705 = vmul.f32 %v671, %v689
    %v706 = vmul.f32 %v673, %v690
    %v707 = vpack.c.bf16 %v692, %v691
    %v708 = vpack.c.bf16 %v694, %v693
    %v709 = vpack.c.bf16 %v696, %v695
    %v710 = vpack.c.bf16 %v698, %v697
    %v711 = vpack.c.bf16 %v700, %v699
    %v712 = vpack.c.bf16 %v702, %v701
    %v713 = vpack.c.bf16 %v704, %v703
    %v714 = vpack.c.bf16 %v706, %v705
    %v715 = vld [vmem:[#allocation7] sm:$0xf]
    %v716 = vld [vmem:[#allocation7 + $0x4] sm:$0xf]
    %v717 = vld [vmem:[#allocation7 + $0x8] sm:$0xf]
    %v718 = vld [vmem:[#allocation7 + $0xc] sm:$0xf]
    %v719 = vld [vmem:[#allocation7 + $0x10] sm:$0xf]
    %v720 = vld [vmem:[#allocation7 + $0x14] sm:$0xf]
    %v721 = vld [vmem:[#allocation7 + $0x18] sm:$0xf]
    %v722 = vld [vmem:[#allocation7 + $0x1c] sm:$0xf]
    %v723 = vld [vmem:[#allocation7 + $0x20] sm:$0xf]
    %v724 = vld [vmem:[#allocation7 + $0x24] sm:$0xf]
    %v725 = vld [vmem:[#allocation7 + $0x28] sm:$0xf]
    %v726 = vld [vmem:[#allocation7 + $0x2c] sm:$0xf]
    %v727 = vld [vmem:[#allocation7 + $0x30] sm:$0xf]
    %v728 = vld [vmem:[#allocation7 + $0x34] sm:$0xf]
    %v729 = vld [vmem:[#allocation7 + $0x38] sm:$0xf]
    %v730 = vld [vmem:[#allocation7 + $0x3c] sm:$0xf]
    %v731 = vunpack.c.l.bf16 %v62
    %v732 = vunpack.c.l.bf16 %v63
    %v733 = vunpack.c.l.bf16 %v64
    %v734 = vunpack.c.l.bf16 %v65
    %v735 = vunpack.c.l.bf16 %v66
    %v736 = vunpack.c.l.bf16 %v67
    %v737 = vunpack.c.l.bf16 %v68
    %v738 = vunpack.c.l.bf16 %v69
    %v739 = vunpack.c.l.bf16 %v70
    %v740 = vunpack.c.l.bf16 %v71
    %v741 = vunpack.c.l.bf16 %v72
    %v742 = vunpack.c.l.bf16 %v73
    %v743 = vunpack.c.l.bf16 %v74
    %v744 = vunpack.c.l.bf16 %v75
    %v745 = vunpack.c.l.bf16 %v76
    %v746 = vunpack.c.l.bf16 %v77
    %v763 = vunpack.c.l.b16 %v715
    %v764 = vunpack.c.l.b16 %v716
    %v765 = vunpack.c.l.b16 %v717
    %v766 = vunpack.c.l.b16 %v718
    %v767 = vunpack.c.l.b16 %v719
    %v768 = vunpack.c.l.b16 %v720
    %v769 = vunpack.c.l.b16 %v721
    %v770 = vunpack.c.l.b16 %v722
    %v771 = vunpack.c.l.b16 %v723
    %v772 = vunpack.c.l.b16 %v724
    %v773 = vunpack.c.l.b16 %v725
    %v774 = vunpack.c.l.b16 %v726
    %v775 = vunpack.c.l.b16 %v727
    %v776 = vunpack.c.l.b16 %v728
    %v777 = vunpack.c.l.b16 %v729
    %v778 = vunpack.c.l.b16 %v730
    %v779 = vpack.c.b16 %v764, %v763
    %v780 = vpack.c.b16 %v766, %v765
    %v781 = vpack.c.b16 %v768, %v767
    %v782 = vpack.c.b16 %v770, %v769
    %v783 = vpack.c.b16 %v772, %v771
    %v784 = vpack.c.b16 %v774, %v773
    %v785 = vpack.c.b16 %v776, %v775
    %v786 = vpack.c.b16 %v778, %v777
    %795 = vmatpush.bf16.msra.mxu0 %v786
    %796 = vmatpush.bf16.msra.mxu0 %v785
    %797 = vmatpush.bf16.msra.mxu0 %v784
    %798 = vmatpush.bf16.msra.mxu0 %v783
    %799 = vmatpush.bf16.msra.mxu0 %v782
    %800 = vmatpush.bf16.msra.mxu0 %v781
    %801 = vmatpush.bf16.msra.mxu0 %v780
    %802 = vmatpush.bf16.msra.mxu0 %v779
    %803 = vmatmul.bf16.gmra.mxu0 %v707
    %v804 = vpop.f32.mrf.mxu0
    %v805 = vadd.f32 %v731, %v804
    %v806 = vpop.f32.mrf.mxu0
    %v807 = vadd.f32 %v732, %v806
    %808 = vmatmul.bf16.gmra.mxu0 %v708
    %v809 = vpop.f32.mrf.mxu0
    %v810 = vadd.f32 %v733, %v809
    %v811 = vpop.f32.mrf.mxu0
    %v812 = vadd.f32 %v734, %v811
    %813 = vmatmul.bf16.gmra.mxu0 %v709
    %v814 = vpop.f32.mrf.mxu0
    %v815 = vadd.f32 %v735, %v814
    %v816 = vpop.f32.mrf.mxu0
    %v817 = vadd.f32 %v736, %v816
    %818 = vmatmul.bf16.gmra.mxu0 %v710
    %v819 = vpop.f32.mrf.mxu0
    %v820 = vadd.f32 %v737, %v819
    %v821 = vpop.f32.mrf.mxu0
    %v822 = vadd.f32 %v738, %v821
    %823 = vmatmul.bf16.gmra.mxu0 %v711
    %v824 = vpop.f32.mrf.mxu0
    %v825 = vadd.f32 %v739, %v824
    %v826 = vpop.f32.mrf.mxu0
    %v827 = vadd.f32 %v740, %v826
    %828 = vmatmul.bf16.gmra.mxu0 %v712
    %v829 = vpop.f32.mrf.mxu0
    %v830 = vadd.f32 %v741, %v829
    %v831 = vpop.f32.mrf.mxu0
    %v832 = vadd.f32 %v742, %v831
    %833 = vmatmul.bf16.gmra.mxu0 %v713
    %v834 = vpop.f32.mrf.mxu0
    %v835 = vadd.f32 %v743, %v834
    %v836 = vpop.f32.mrf.mxu0
    %v837 = vadd.f32 %v744, %v836
    %838 = vmatmul.bf16.gmra.mxu0 %v714
    %v839 = vpop.f32.mrf.mxu0
    %v840 = vadd.f32 %v745, %v839
    %v841 = vpop.f32.mrf.mxu0
    %v842 = vadd.f32 %v746, %v841
    %843 = vdwg.mxu0
    %844 = vst [vmem:[#allocation8] sm:$0xff] %v805
    %845 = vst [vmem:[#allocation8 + $0x8] sm:$0xff] %v807
    %846 = vst [vmem:[#allocation8 + $0x10] sm:$0xff] %v810
    %847 = vst [vmem:[#allocation8 + $0x18] sm:$0xff] %v812
    %848 = vst [vmem:[#allocation8 + $0x20] sm:$0xff] %v815
    %849 = vst [vmem:[#allocation8 + $0x28] sm:$0xff] %v817
    %850 = vst [vmem:[#allocation8 + $0x30] sm:$0xff] %v820
    %851 = vst [vmem:[#allocation8 + $0x38] sm:$0xff] %v822
    %852 = vst [vmem:[#allocation8 + $0x40] sm:$0xff] %v825
    %853 = vst [vmem:[#allocation8 + $0x48] sm:$0xff] %v827
    %854 = vst [vmem:[#allocation8 + $0x50] sm:$0xff] %v830
    %855 = vst [vmem:[#allocation8 + $0x58] sm:$0xff] %v832
    %856 = vst [vmem:[#allocation8 + $0x60] sm:$0xff] %v835
    %857 = vst [vmem:[#allocation8 + $0x68] sm:$0xff] %v837
    %858 = vst [vmem:[#allocation8 + $0x70] sm:$0xff] %v840
    %859 = vst [vmem:[#allocation8 + $0x78] sm:$0xff] %v842
    // Predicated region
    $region26: #{tpu_custom_call.1} parent=1 // pred_check
      _
    $region27: #{tpu_custom_call.1} parent=1 // pred_check_branch
      %861 = sbr.rel (0) target = $region29
    $region28: #{tpu_custom_call.1} parent=1 // pred_region
      %863 = vsyncadd [#allocation4], 0
      %s864 = sshll.u32 [#allocation8], 4
      %s865 = int_to_ptr.vmem [resolvable:$true] %s864
      %s866 = sshll.u32 %s3, 4
      %s867 = int_to_ptr.hbm [resolvable:$true] %s866
      %872 = dma.vmem_to_hbm [thread:$0]  %s865, 2048, %s867, [#allocation4], 128, 128, 8
    $region29: #{tpu_custom_call.1} parent=1 // pred_fallthru
      _
    // Predicated region
    $region30: #{tpu_custom_call.1} parent=1 // pred_check
      _
    $region31: #{tpu_custom_call.1} parent=1 // pred_check_branch
      %874 = sbr.rel (0) target = $region33
    $region32: #{tpu_custom_call.1} parent=1 // pred_region
      %876 = dma.done [#allocation4], 2048
    $region33: #{tpu_custom_call.1} parent=1 // pred_fallthru
      _
    %877 = vsyncpa [#allocation3], 1
    %878 = vsyncpa [#allocation6], 1
    %879 = vsyncpa [#allocation4], 1

</llo_original>
